<compile_context>
chip_gen: v5e
topology: v5e:2x2
jax: 0.10.0
libtpu: 0.0.40
codegen_flags: <defaults>
</compile_context>

<pallas_src>
import jax
import jax.numpy as jnp
from jax import lax
from jax.experimental import pallas as pl
from jax.experimental.pallas import tpu as pltpu

HIDDEN = 32


def _round_up(x, m):
    return ((x + m - 1) // m) * m


def _cdiv(a, b):
    return -(-a // b)


def beta_network_kernel(x_ref, w1_ref, b1_ref, w2_ref, b2_ref, out_ref):
    # fc1 on the MXU: (TB, D) @ (D, 32) -> (TB, 32), f32 accumulate.
    h = jnp.dot(x_ref[...], w1_ref[...], preferred_element_type=jnp.float32)
    h = jnp.maximum(h + b1_ref[...], 0.0)                     # bias + ReLU (VPU)

    # fc2 directly in lane-major form: w2 (1, 32) contracted with h (TB, 32)
    # over the hidden axis -> (1, TB).  NT dot on the MXU; no XLU transpose.
    z = lax.dot_general(w2_ref[...], h, (((1,), (1,)), ((), ())),
                        preferred_element_type=jnp.float32)
    z = z + b2_ref[0, 0]                                       # scalar bias from SMEM

    # Exact sigmoid (EUP exp + VPU divide); memory-bound kernel -> free.
    beta = 1.0 / (1.0 + jnp.exp(-z))                           # (1, TB)

    # Lane-dense full-width store of the (1, TB) row.
    out_ref[...] = beta.astype(out_ref.dtype)


def _xla_forward(x, w1, b1, w2, b2):
    """Plain XLA path (reference / small-batch fallback)."""
    h = jnp.maximum(x @ w1 + b1, 0.0)
    return jax.nn.sigmoid(h @ w2.T + b2)


def _choose_tile(B, D, itemsize, tile_batch):
    """Pick a batch tile: ~2 MiB of x per DMA, >=2 tiles for big batches."""
    if tile_batch is None:
        target_bytes = 2 * 1024 * 1024
        tile_batch = max(128, min(65536, _round_up(target_bytes // (D * itemsize), 128)))
    b_aligned = _round_up(B, 8)
    if b_aligned <= 256:
        # Small batch: one full-array tile (correct even if not 128-aligned).
        return b_aligned
    # Large batch: at least 2 tiles (v7x megacore + pipeline overlap),
    # at most `tile_batch` rows per tile, 128-aligned for lane-dense output.
    return min(tile_batch, _round_up(_cdiv(b_aligned, 2), 128))


def beta_network_forward(x, w1, b1, w2, b2, *, tile_batch=None, min_pallas_batch=2048):
    """x: (B, D); w1: (D, 32); b1: (1, 32); w2: (1, 32); b2: (1, 1) -> (B, 1) f32."""
    B, D = x.shape

    # Small-batch fallback: pallas launch + pipeline prologue dominate; XLA
    # fusion is faster and removes all padding/reshape plumbing.
    if B < min_pallas_batch:
        return _xla_forward(x, w1, b1, w2, b2).astype(jnp.float32)

    itemsize = jnp.dtype(x.dtype).itemsize
    TB = _choose_tile(B, D, itemsize, tile_batch)
    num_tiles = _cdiv(B, TB)
    Bp = num_tiles * TB          # output row padded to full blocks; x is NOT padded

    # VMEM budget (v7x-aware): double-buffered x tile + f32 h (+ temps) +
    # double-buffered output row + weights, with 2x headroom, capped at 64 MiB.
    vmem_est = (2 * TB * D * itemsize          # x double buffer
                + 2 * TB * HIDDEN * 4          # h + elementwise temps (f32)
                + 2 * TB * 4                   # output row double buffer
                + D * HIDDEN * 4 + 2 * HIDDEN * 4 + 4)
    vmem_limit = int(min(64 * 1024 * 1024, max(32 * 1024 * 1024, 2 * vmem_est)))

    cost = pl.CostEstimate(
        flops=2 * B * D * HIDDEN + 2 * B * HIDDEN,
        transcendentals=B,
        bytes_accessed=B * D * itemsize + D * HIDDEN * 4 + 2 * HIDDEN * 4 + 4 + Bp * 4,
    )

    out_row = pl.pallas_call(
        beta_network_kernel,
        out_shape=jax.ShapeDtypeStruct((1, Bp), jnp.float32),
        grid=(num_tiles,),
        in_specs=[
            pl.BlockSpec((TB, D), lambda i: (i, 0)),            # x: batch-tiled, pipelined
            pl.BlockSpec((D, HIDDEN), lambda i: (0, 0)),        # w1: VMEM-resident
            pl.BlockSpec((1, HIDDEN), lambda i: (0, 0)),        # b1: VMEM-resident
            pl.BlockSpec((1, HIDDEN), lambda i: (0, 0)),        # w2 row: VMEM-resident
            pl.BlockSpec(memory_space=pltpu.MemorySpace.SMEM),  # b2: scalar in SMEM
        ],
        out_specs=pl.BlockSpec((1, TB), lambda i: (0, i)),      # lane-dense output row
        compiler_params=pltpu.CompilerParams(
            dimension_semantics=("parallel",),   # shard batch tiles across TCs (v7x)
            vmem_limit_bytes=vmem_limit,
        ),
        cost_estimate=cost,
    )(x, w1, b1, w2, b2)

    # (1, Bp) row-major -> (Bp, 1); drop the boundary-block garbage lanes >= B.
    return out_row.reshape(Bp, 1)[:B]


def init_params(key, input_dim):
    """Deterministic PyTorch-Linear-style init (uniform(-1/sqrt(fan_in), +))."""
    k1, k2, k3, k4 = jax.random.split(key, 4)
    bound1 = 1.0 / jnp.sqrt(float(input_dim))
    bound2 = 1.0 / jnp.sqrt(float(HIDDEN))
    w1 = jax.random.uniform(k1, (input_dim, HIDDEN), jnp.float32, -bound1, bound1)
    b1 = jax.random.uniform(k2, (1, HIDDEN), jnp.float32, -bound1, bound1)
    w2 = jax.random.uniform(k3, (1, HIDDEN), jnp.float32, -bound2, bound2)  # torch (out,in)
    b2 = jax.random.uniform(k4, (1, 1), jnp.float32, -bound2, bound2)
    return w1, b1, w2, b2


if __name__ == "__main__":
    key = jax.random.PRNGKey(0)
    kx, kp, kx2 = jax.random.split(key, 3)

    batch, input_dim = 8, 16
    x = jax.random.normal(kx, (batch, input_dim), jnp.float32)
    w1, b1, w2, b2 = init_params(kp, input_dim)
    ref = _xla_forward(x, w1, b1, w2, b2)

    # 1) Small batch forced through the Pallas kernel (single full-array tile).
    #    Sigmoid is exact; remaining tolerance only covers MXU default-precision
    #    f32 matmul rounding differences between the Pallas and XLA dot paths.
    out = jax.block_until_ready(
        beta_network_forward(x, w1, b1, w2, b2, min_pallas_batch=0))
    assert out.shape == (batch, 1)
    assert jnp.allclose(out, ref, atol=1e-3, rtol=1e-3), "mismatch vs reference (small)"

    # 2) Ragged multi-tile batch: boundary input block (no jnp.pad of x),
    #    multi-step grid pipelining, lane-dense output row.
    batch2 = 300
    x2 = jax.random.normal(kx2, (batch2, input_dim), jnp.float32)
    out2 = jax.block_until_ready(
        beta_network_forward(x2, w1, b1, w2, b2, tile_batch=128, min_pallas_batch=0))
    ref2 = _xla_forward(x2, w1, b1, w2, b2)
    assert out2.shape == (batch2, 1)
    assert jnp.allclose(out2, ref2, atol=1e-3, rtol=1e-3), "mismatch vs reference (tiled)"

    # 3) Small-batch XLA fallback path (default threshold).
    out3 = jax.block_until_ready(beta_network_forward(x, w1, b1, w2, b2))
    assert out3.shape == (batch, 1)
    assert jnp.allclose(out3, ref, atol=1e-6, rtol=1e-6), "mismatch vs reference (fallback)"

    print("KERNEL_OK")
</pallas_src>

<mosaic_0001>
module attributes {stable_mosaic.version = 11 : i64} {
  func.func @beta_network_kernel(%arg0: i32, %arg1: memref<8x16xf32, #tpu.memory_space<vmem>>, %arg2: memref<16x32xf32, #tpu.memory_space<vmem>>, %arg3: memref<1x32xf32, #tpu.memory_space<vmem>>, %arg4: memref<1x32xf32, #tpu.memory_space<vmem>>, %arg5: memref<1x1xf32, #tpu.memory_space<smem>>, %arg6: memref<1x8xf32, #tpu.memory_space<vmem>>) attributes {dimension_semantics = [#tpu.dimension_semantics<parallel>], iteration_bounds = array<i64: 1>, scalar_prefetch = 0 : i64, scratch_operands = 0 : i64, tpu.core_type = #tpu.core_type<tc>, window_params = [{transform_indices = @transform_0, window_bounds = array<i64: 8, 16>}, {pipeline_mode = #tpu.pipeline_mode<synchronous>, transform_indices = @transform_1, window_bounds = array<i64: 16, 32>}, {pipeline_mode = #tpu.pipeline_mode<synchronous>, transform_indices = @transform_2, window_bounds = array<i64: 1, 32>}, {pipeline_mode = #tpu.pipeline_mode<synchronous>, transform_indices = @transform_3, window_bounds = array<i64: 1, 32>}, {transform_indices = @transform_4, window_bounds = array<i64: 1, 1>}, {transform_indices = @transform_5, window_bounds = array<i64: 1, 8>}]} {
    %c0 = arith.constant 0 : index
    %c0_0 = arith.constant 0 : index
    %0 = vector.load %arg1[%c0, %c0_0] : memref<8x16xf32, #tpu.memory_space<vmem>>, vector<8x16xf32>
    %c0_1 = arith.constant 0 : index
    %c0_2 = arith.constant 0 : index
    %1 = vector.load %arg2[%c0_1, %c0_2] : memref<16x32xf32, #tpu.memory_space<vmem>>, vector<16x32xf32>
    %cst = arith.constant dense<0.000000e+00> : vector<8x32xf32>
    %2 = tpu.matmul %0, %1, %cst {dimension_numbers = #tpu.dot_dimension_numbers<[1], [0], [0], [1], [0, 0, 1, 1], [], []>} : vector<8x16xf32>, vector<16x32xf32>, vector<8x32xf32> -> vector<8x32xf32>
    %c0_3 = arith.constant 0 : index
    %c0_4 = arith.constant 0 : index
    %3 = vector.load %arg3[%c0_3, %c0_4] : memref<1x32xf32, #tpu.memory_space<vmem>>, vector<1x32xf32>
    %4 = vector.broadcast %3 : vector<1x32xf32> to vector<8x32xf32>
    %5 = arith.addf %2, %4 : vector<8x32xf32>
    %cst_5 = arith.constant 0.000000e+00 : f32
    %6 = vector.broadcast %cst_5 : f32 to vector<8x32xf32>
    %7 = arith.maximumf %5, %6 : vector<8x32xf32>
    %c0_6 = arith.constant 0 : index
    %c0_7 = arith.constant 0 : index
    %8 = vector.load %arg4[%c0_6, %c0_7] : memref<1x32xf32, #tpu.memory_space<vmem>>, vector<1x32xf32>
    %cst_8 = arith.constant dense<0.000000e+00> : vector<1x8xf32>
    %9 = tpu.matmul %8, %7, %cst_8 {dimension_numbers = #tpu.dot_dimension_numbers<[1], [1], [0], [0], [0, 0, 1, 0], [], []>} : vector<1x32xf32>, vector<8x32xf32>, vector<1x8xf32> -> vector<1x8xf32>
    %c0_9 = arith.constant 0 : index
    %c0_10 = arith.constant 0 : index
    %10 = memref.load %arg5[%c0_9, %c0_10] : memref<1x1xf32, #tpu.memory_space<smem>>
    %11 = vector.broadcast %10 : f32 to vector<1x8xf32>
    %12 = arith.addf %9, %11 : vector<1x8xf32>
    %cst_11 = arith.constant 0.000000e+00 : f32
    %13 = vector.broadcast %cst_11 : f32 to vector<1x8xf32>
    %14 = arith.subf %13, %12 : vector<1x8xf32>
    %15 = math.exp %14 : vector<1x8xf32>
    %cst_12 = arith.constant 1.000000e+00 : f32
    %16 = vector.broadcast %cst_12 : f32 to vector<1x8xf32>
    %17 = arith.addf %16, %15 : vector<1x8xf32>
    %cst_13 = arith.constant 1.000000e+00 : f32
    %18 = vector.broadcast %cst_13 : f32 to vector<1x8xf32>
    %19 = arith.divf %18, %17 : vector<1x8xf32>
    %c0_14 = arith.constant 0 : index
    %c0_15 = arith.constant 0 : index
    %20 = vector.load %arg6[%c0_14, %c0_15] : memref<1x8xf32, #tpu.memory_space<vmem>>, vector<1x8xf32>
    tpu.vector_store %arg6[%c0_14, %c0_15], %19 {strides = array<i32>} : memref<1x8xf32, #tpu.memory_space<vmem>>, vector<1x8xf32>,
    return
  }
  func.func @transform_0(%arg0: i32) -> (i32, i32) {
    %c0_i32 = arith.constant 0 : i32
    %c0_i32_0 = arith.constant 0 : i32
    return %arg0, %c0_i32 : i32, i32
  }
  func.func @transform_1(%arg0: i32) -> (i32, i32) {
    %c0_i32 = arith.constant 0 : i32
    %c0_i32_0 = arith.constant 0 : i32
    %c0_i32_1 = arith.constant 0 : i32
    return %c0_i32, %c0_i32_0 : i32, i32
  }
  func.func @transform_2(%arg0: i32) -> (i32, i32) {
    %c0_i32 = arith.constant 0 : i32
    %c0_i32_0 = arith.constant 0 : i32
    %c0_i32_1 = arith.constant 0 : i32
    return %c0_i32, %c0_i32_0 : i32, i32
  }
  func.func @transform_3(%arg0: i32) -> (i32, i32) {
    %c0_i32 = arith.constant 0 : i32
    %c0_i32_0 = arith.constant 0 : i32
    %c0_i32_1 = arith.constant 0 : i32
    return %c0_i32, %c0_i32_0 : i32, i32
  }
  func.func @transform_4(%arg0: i32) -> (i32, i32) {
    %c0_i32 = arith.constant 0 : i32
    %c0_i32_0 = arith.constant 0 : i32
    %c0_i32_1 = arith.constant 0 : i32
    return %c0_i32, %c0_i32_0 : i32, i32
  }
  func.func @transform_5(%arg0: i32) -> (i32, i32) {
    %c0_i32 = arith.constant 0 : i32
    %c0_i32_0 = arith.constant 0 : i32
    return %c0_i32, %arg0 : i32, i32
  }
}

</mosaic_0001>

<llo_original>
// kernel: tpu_custom_call.1
$region0: #{tpu_custom_call.1}
  #allocation0 [shape = 'u32[]', space=smem, size = 0x4, offset = 0x4, fixed_abs, tag = 'smem constant byte address 0x4 - core index']
  #allocation1 [shape = 'u32[72,128]{1,0:T(1,128)}', space=vmem, size = 0x9000, scoped, tag = 'internal scratch']
  #allocation2 [shape = 'f32[1,1]{1,0:T(1,128)S(6)}', space=smem, size = 0x200, scoped, tag = 'scoped memory for tpu_custom_call.1']
  %s0 = inlined_call_operand.hbm [shape: f32[8,16], index: 0, kind: input, shape index: {}]
  %s1 = inlined_call_operand.hbm [shape: f32[16,32], index: 1, kind: input, shape index: {}]
  %s2 = inlined_call_operand.vmem [shape: f32[1,32], index: 2, kind: input, shape index: {}]
  %s3 = inlined_call_operand.vmem [shape: f32[1,32], index: 3, kind: input, shape index: {}]
  %s4 = inlined_call_operand.<no memory space> [shape: f32[1,1], index: 4, kind: input, shape index: {}]
  %s5 = inlined_call_operand.hbm [shape: f32[1,8], index: 5, kind: output, shape index: {}]
  %s6 = sld [smem:[#allocation0]]
  $region38: #{tpu_custom_call.1} parent=0
    _
  %s8 = ssub.s32 1, %s6
  %s9 = scalar_select 0, %s8, %s6
  %10 = sst [smem:[#allocation2]] %s4
  $region1: #{tpu_custom_call.1} parent=0
    #allocation3 [shape = 'u8[4096]{0}', space=vmem, size = 0x1000, scoped, tag = 'input window, operand 0, single buffered']
    #allocation4 [shape = 's32[1]{0}', space=sflag, size = 0x4, scoped, tag = 'scoped memory for tpu_custom_call.1']
    #allocation5 [shape = 's32[1]{0}', space=sflag, size = 0x4, scoped, tag = 'scoped memory for tpu_custom_call.1']
    #allocation6 [shape = 'u8[8192]{0}', space=vmem, size = 0x2000, scoped, tag = 'input window, operand 1, single buffered']
    #allocation7 [shape = 's32[1]{0}', space=sflag, size = 0x4, scoped, tag = 'scoped memory for tpu_custom_call.1']
    #allocation8 [shape = 'u8[512]{0}', space=vmem, size = 0x400, scoped, tag = 'output window, operand 0, single buffered']
    %11 = vsyncpa [#allocation4], 0
    %12 = vsyncpa [#allocation7], 0
    %13 = vsyncpa [#allocation5], 0
    // Predicated region
    $region2: #{tpu_custom_call.1} parent=1 // pred_check
      _
    $region3: #{tpu_custom_call.1} parent=1 // pred_check_branch
      %15 = sbr.rel (0) target = $region5
    $region4: #{tpu_custom_call.1} parent=1 // pred_region
      %17 = vsyncadd [#allocation4], 0
      %s19 = sshll.u32 %s0, 4
      %s20 = int_to_ptr.hbm [resolvable:$true] %s19
      %s21 = sshll.u32 [#allocation3], 4
      %s22 = int_to_ptr.vmem [resolvable:$true] %s21
      %24 = dma.hbm_to_vmem [thread:$0]  %s20, 128, %s22, [#allocation4]
    $region5: #{tpu_custom_call.1} parent=1 // pred_fallthru
      _
    // Predicated region
    $region6: #{tpu_custom_call.1} parent=1 // pred_check
      _
    $region7: #{tpu_custom_call.1} parent=1 // pred_check_branch
      %26 = sbr.rel (0) target = $region9
    $region8: #{tpu_custom_call.1} parent=1 // pred_region
      %28 = vsyncadd [#allocation7], 0
      %s29 = sshll.u32 %s1, 4
      %s30 = int_to_ptr.hbm [resolvable:$true] %s29
      %s31 = sshll.u32 [#allocation6], 4
      %s32 = int_to_ptr.vmem [resolvable:$true] %s31
      %37 = dma.hbm_to_vmem [thread:$0]  %s30, 256, %s32, [#allocation7], 128, 128, 8
    $region9: #{tpu_custom_call.1} parent=1 // pred_fallthru
      _
    // Predicated region
    $region10: #{tpu_custom_call.1} parent=1 // pred_check
      _
    $region11: #{tpu_custom_call.1} parent=1 // pred_check_branch
      %39 = sbr.rel (0) target = $region13
    $region12: #{tpu_custom_call.1} parent=1 // pred_region
      _
    $region13: #{tpu_custom_call.1} parent=1 // pred_fallthru
      _
    // Predicated region
    $region14: #{tpu_custom_call.1} parent=1 // pred_check
      _
    $region15: #{tpu_custom_call.1} parent=1 // pred_check_branch
      %41 = sbr.rel (0) target = $region17
    $region16: #{tpu_custom_call.1} parent=1 // pred_region
      _
    $region17: #{tpu_custom_call.1} parent=1 // pred_fallthru
      _
    // Predicated region
    $region18: #{tpu_custom_call.1} parent=1 // pred_check
      _
    $region19: #{tpu_custom_call.1} parent=1 // pred_check_branch
      %43 = sbr.rel (0) target = $region21
    $region20: #{tpu_custom_call.1} parent=1 // pred_region
      _
    $region21: #{tpu_custom_call.1} parent=1 // pred_fallthru
      _
    // Predicated region
    $region22: #{tpu_custom_call.1} parent=1 // pred_check
      _
    $region23: #{tpu_custom_call.1} parent=1 // pred_check_branch
      %45 = sbr.rel (0) target = $region25
    $region24: #{tpu_custom_call.1} parent=1 // pred_region
      %47 = dma.done [#allocation4], 128
    $region25: #{tpu_custom_call.1} parent=1 // pred_fallthru
      _
    // Predicated region
    $region26: #{tpu_custom_call.1} parent=1 // pred_check
      _
    $region27: #{tpu_custom_call.1} parent=1 // pred_check_branch
      %49 = sbr.rel (0) target = $region29
    $region28: #{tpu_custom_call.1} parent=1 // pred_region
      %51 = dma.done [#allocation7], 256
    $region29: #{tpu_custom_call.1} parent=1 // pred_fallthru
      _
    %v52 = vld [vmem:[#allocation3] sm:$0xff]
    %v53 = vld [vmem:[#allocation6] sm:$0xff]
    %v54 = vld [vmem:[#allocation6 + $0x8] sm:$0xff]
    %v55 = vld [vmem:[%s2] sm:$0x1]
    %v57 = vperm.slane %v55, 0
    %vm59 = vcmask 130048
    %v61 = vsel %vm59, %v52, 0
    %63 = vmatpush.msra.mxu0 0.0
    %64 = vmatpush.msra.mxu0 0.0
    %65 = vmatpush.msra.mxu0 0.0
    %66 = vmatpush.msra.mxu0 0.0
    %67 = vmatpush.msra.mxu0 0.0
    %68 = vmatpush.msra.mxu0 0.0
    %69 = vmatpush.msra.mxu0 0.0
    %70 = vmatpush.msra.mxu0 0.0
    %71 = vmatpush.msra.mxu0 0.0
    %72 = vmatpush.msra.mxu0 0.0
    %73 = vmatpush.msra.mxu0 0.0
    %74 = vmatpush.msra.mxu0 0.0
    %75 = vmatpush.msra.mxu0 0.0
    %76 = vmatpush.msra.mxu0 0.0
    %77 = vmatpush.msra.mxu0 %v54
    %78 = vmatpush.msra.mxu0 %v53
    %79 = vmatmul.f32.gmra.mxu0 %v61
    %v80 = vpop.f32.mrf.mxu0
    %v81 = vadd.f32 %v57, %v80
    %82 = vdwg.mxu0
    %v83 = vmax.f32 %v81, 0.0
    %v84 = vld [vmem:[%s3] sm:$0x1]
    %s85 = sld [smem:[#allocation2]]
    %v86 = vstv %s85
    %vm87 = vcmask 261120
    %v89 = vsel %vm87, %v84, 0
    %v92 = vsel %vm87, %v83, 0
    %94 = vmatpush.xpose.msra.mxu0 0.0
    %95 = vmatpush.xpose.msra.mxu0 0.0
    %96 = vmatpush.xpose.msra.mxu0 0.0
    %97 = vmatpush.xpose.msra.mxu0 0.0
    %98 = vmatpush.xpose.msra.mxu0 0.0
    %99 = vmatpush.xpose.msra.mxu0 0.0
    %100 = vmatpush.xpose.msra.mxu0 0.0
    %101 = vmatpush.xpose.msra.mxu0 0.0
    %102 = vmatpush.xpose.msra.mxu0 0.0
    %103 = vmatpush.xpose.msra.mxu0 0.0
    %104 = vmatpush.xpose.msra.mxu0 0.0
    %105 = vmatpush.xpose.msra.mxu0 0.0
    %106 = vmatpush.xpose.msra.mxu0 0.0
    %107 = vmatpush.xpose.msra.mxu0 0.0
    %108 = vmatpush.xpose.msra.mxu0 0.0
    %109 = vmatpush.xpose.msra.mxu0 %v92
    %110 = vmatmul.f32.gmra.mxu0 %v89
    %v111 = vpop.f32.mrf.mxu0
    %v112 = vadd.f32 %v86, %v111
    %113 = vdwg.mxu0
    %v114 = vsub.f32 0.0, %v112
    %v115 = vmul.f32 %v114, 1.442695
    %v116 = vpow.pop %v115
    %v117 = vadd.f32 %v116, 1.0
    %v118 = vrcp.pop %v117
    %v119 = vmul.f32 %v117, %v118
    %v120 = vsub.f32 1.0, %v119
    %v121 = vmul.f32 %v118, %v120
    %v122 = vadd.f32 %v118, %v121
    %vm123 = vweird.f32 %v117
    %vm124 = vweird.f32 %v118
    %vm125 = vmor %vm123, %vm124
    %v126 = vsel %vm125, %v118, %v122
    %v127 = vand.u32 2147483647, %v117
    %vm128 = vcmp.eq.f32.partialorder %v127, 8.507059e+37
    %v129 = vand.u32 %v117, 2147483648
    %v130 = vor.u32 1.1754944e-38, %v129
    %v131 = vsel %vm128, %v130, %v126
    %v132 = vmul.f32 1.0, %v131
    %vm133 = vcmask 57344
    %134 = vst.msk [vmem:[#allocation8] sm:$0x1] %vm133, %v132
    // Predicated region
    $region30: #{tpu_custom_call.1} parent=1 // pred_check
      _
    $region31: #{tpu_custom_call.1} parent=1 // pred_check_branch
      %136 = sbr.rel (0) target = $region33
    $region32: #{tpu_custom_call.1} parent=1 // pred_region
      %138 = vsyncadd [#allocation5], 0
      %s140 = sshll.u32 [#allocation8], 4
      %s141 = int_to_ptr.vmem [resolvable:$true] %s140
      %s142 = sshll.u32 %s5, 4
      %s143 = int_to_ptr.hbm [resolvable:$true] %s142
      %145 = dma.vmem_to_hbm [thread:$0]  %s141, 16, %s143, [#allocation5]
    $region33: #{tpu_custom_call.1} parent=1 // pred_fallthru
      _
    // Predicated region
    $region34: #{tpu_custom_call.1} parent=1 // pred_check
      _
    $region35: #{tpu_custom_call.1} parent=1 // pred_check_branch
      %147 = sbr.rel (0) target = $region37
    $region36: #{tpu_custom_call.1} parent=1 // pred_region
      %149 = dma.done [#allocation5], 16
    $region37: #{tpu_custom_call.1} parent=1 // pred_fallthru
      _
    %150 = vsyncpa [#allocation4], 1
    %151 = vsyncpa [#allocation7], 1
    %152 = vsyncpa [#allocation5], 1

</llo_original>
